<compile_context>
chip_gen: v5e
topology: v5e:2x2
jax: 0.10.0
libtpu: 0.0.40
codegen_flags: <defaults>
</compile_context>

<pallas_src>
import numpy as np
import jax
import jax.numpy as jnp
from jax import lax
from jax.experimental import pallas as pl
from jax.experimental.pallas import tpu as pltpu


def _lstm_predictor_kernel(x_ref, wih_ref, whh_ref, b_ref, wlin_ref, blin_ref, o_ref):
    wih = wih_ref[...]            # (F, 4H)
    whh = whh_ref[...]            # (H, 4H)
    b = b_ref[...]                # (1, 4H)
    H = whh.shape[0]
    G = 4 * H

    x = x_ref[...]                # (TB, T, F)
    TB, T, F = x.shape

    # ---- Input projection for ALL timesteps, hoisted off the serial recurrence ----
    # One MXU pass in the prologue; the T-step dependence chain below then only pays
    # one h @ w_hh matmul per step.
    gx = jnp.dot(x.reshape(TB * T, F), wih, preferred_element_type=jnp.float32)
    gates_x = gx.reshape(TB, T, G) + b[None, :, :]          # (TB, T, 4H)

    h = jnp.zeros((TB, H), jnp.float32)
    c = jnp.zeros((TB, H), jnp.float32)

    def step(gx_t, h, c):
        # Only ONE MXU push/pop on the serial h-chain per step.
        gates = gx_t + jnp.dot(h, whh, preferred_element_type=jnp.float32)  # (TB, 4H)
        # Two full-width EUP pushes instead of four/five partial-width ones.
        sig = jax.nn.sigmoid(gates)
        tnh = jnp.tanh(gates)
        i_g = sig[:, 0 * H:1 * H]
        f_g = sig[:, 1 * H:2 * H]
        g_g = tnh[:, 2 * H:3 * H]
        o_g = sig[:, 3 * H:4 * H]
        c = f_g * c + i_g * g_g
        h = o_g * jnp.tanh(c)
        return h, c

    if T <= 64:
        # Per-step live state is only a handful of vregs at small TB, so full unroll
        # gives the LLO scheduler visibility to interleave EUP pushes with VPU updates.
        for t in range(T):
            h, c = step(gates_x[:, t, :], h, c)
    else:
        # Larger T: bound vreg live ranges with a partially-unrolled carried loop.
        def body(t, carry):
            hh, cc = carry
            gx_t = lax.dynamic_slice_in_dim(gates_x, t, 1, axis=1)[:, 0, :]
            return step(gx_t, hh, cc)
        h, c = lax.fori_loop(0, T, body, (h, c), unroll=8)

    # ---- linear(out[:, -1, :]) ----
    wlin = wlin_ref[...]          # (H, O)
    blin = blin_ref[...]          # (1, O)
    O = wlin.shape[1]
    if O == 1:
        # VPU multiply + lane reduce: avoids a trailing degenerate N=1 MXU matmul
        # (MRF drain latency) in the epilogue.
        out = jnp.sum(h * wlin[:, 0][None, :], axis=-1, keepdims=True) + blin
    else:
        out = jnp.dot(h, wlin, preferred_element_type=jnp.float32) + blin
    o_ref[...] = out.astype(o_ref.dtype)


def _select_batch_tile(B, T, F, H, O, vmem_budget_bytes=12 << 20):
    """Pick (tb, padded_B).

    One fat block unless the per-block VMEM footprint would exceed the budget, which
    is kept below every chip's default scoped VMEM (16 MiB on v5e, 32 MiB v6e/v7x,
    and well inside v7x's 64 MiB physical VMEM). Per batch row (f32 bytes):
      x block (double-buffered): 2*T*F*4
      hoisted gates_x temp:      T*4H*4
      h/c + misc vregs:          ~4*H*4
      out block (double-buf):    2*O*4
    """
    per_row = (2 * T * F + T * 4 * H + 4 * H + 2 * O) * 4
    tb_cap = max(8, vmem_budget_bytes // max(per_row, 1))
    if B <= tb_cap:
        return B, B                       # single block; block shape == full array dims
    tb = (tb_cap // 8) * 8                # sublane-aligned, stays large (>=8)
    padded_B = ((B + tb - 1) // tb) * tb  # pad so every block is full (no remainder)
    return tb, padded_B
    # TODO(synk): if even tb=8 exceeds the budget (huge T), chunk the gates_x
    # precompute over T inside the kernel instead of shrinking tb further.


def sp500_predictor_forward(x, w_ih, w_hh, b_ih, b_hh, w_lin, b_lin):
    """x: (B, T, F) float32.  Weights in PyTorch layout:
       w_ih: (4H, F), w_hh: (4H, H), b_ih/b_hh: (4H,), w_lin: (O, H), b_lin: (O,)."""
    B, T, F = x.shape
    H = w_hh.shape[1]
    O = w_lin.shape[0]

    # Layout plumbing (outside the kernel): row-major matmul form, fold the biases.
    w_ih_t = jnp.transpose(w_ih)                    # (F, 4H)
    w_hh_t = jnp.transpose(w_hh)                    # (H, 4H)
    b = (b_ih + b_hh).reshape(1, 4 * H)             # (1, 4H)
    w_lin_t = jnp.transpose(w_lin)                  # (H, O)
    b_lin2 = b_lin.reshape(1, O)                    # (1, O)

    tb, padded_B = _select_batch_tile(B, T, F, H, O)
    x_in = x if padded_B == B else jnp.pad(x, ((0, padded_B - B), (0, 0), (0, 0)))
    grid = (padded_B // tb,)

    full2 = lambda shp: pl.BlockSpec(shp, lambda i: (0, 0))

    out = pl.pallas_call(
        _lstm_predictor_kernel,
        out_shape=jax.ShapeDtypeStruct((padded_B, O), jnp.float32),
        grid=grid,
        in_specs=[
            pl.BlockSpec((tb, T, F), lambda i: (i, 0, 0)),
            full2((F, 4 * H)),
            full2((H, 4 * H)),
            full2((1, 4 * H)),
            full2((H, O)),
            full2((1, O)),
        ],
        out_specs=pl.BlockSpec((tb, O), lambda i: (i, 0)),
        compiler_params=pltpu.CompilerParams(
            dimension_semantics=("parallel",)),
    )(x_in, w_ih_t, w_hh_t, b, w_lin_t, b_lin2)
    return out[:B]


def _reference_forward(x, w_ih, w_hh, b_ih, b_hh, w_lin, b_lin):
    """Pure-JAX reference mirroring torch.nn.LSTM (batch_first) + Linear."""
    B, T, F = x.shape
    H = w_hh.shape[1]
    h = jnp.zeros((B, H), jnp.float32)
    c = jnp.zeros((B, H), jnp.float32)
    for t in range(T):
        g = x[:, t, :] @ w_ih.T + b_ih + h @ w_hh.T + b_hh
        i = jax.nn.sigmoid(g[:, 0 * H:1 * H])
        f = jax.nn.sigmoid(g[:, 1 * H:2 * H])
        gg = jnp.tanh(g[:, 2 * H:3 * H])
        o = jax.nn.sigmoid(g[:, 3 * H:4 * H])
        c = f * c + i * gg
        h = o * jnp.tanh(c)
    return h @ w_lin.T + b_lin


if __name__ == "__main__":
    B, T, F, H, O = 2, 8, 1, 32, 1   # small shapes consistent with the module

    key = jax.random.PRNGKey(0)
    ks = jax.random.split(key, 7)
    bound = 1.0 / np.sqrt(H)         # PyTorch default init range for LSTM/Linear
    u = lambda k, shp: jax.random.uniform(k, shp, jnp.float32, -bound, bound)

    x = jax.random.normal(ks[0], (B, T, F), jnp.float32)
    w_ih = u(ks[1], (4 * H, F))
    w_hh = u(ks[2], (4 * H, H))
    b_ih = u(ks[3], (4 * H,))
    b_hh = u(ks[4], (4 * H,))
    w_lin = u(ks[5], (O, H))
    b_lin = u(ks[6], (O,))

    out = sp500_predictor_forward(x, w_ih, w_hh, b_ih, b_hh, w_lin, b_lin)
    out = jax.block_until_ready(out)

    ref = _reference_forward(x, w_ih, w_hh, b_ih, b_hh, w_lin, b_lin)
    np.testing.assert_allclose(np.asarray(out), np.asarray(ref), rtol=1e-5, atol=1e-5)

    print("KERNEL_OK")
</pallas_src>

<mosaic_0001>
module attributes {stable_mosaic.version = 11 : i64} {
  func.func @_lstm_predictor_kernel(%arg0: i32, %arg1: memref<2x8x1xf32, #tpu.memory_space<vmem>>, %arg2: memref<1x128xf32, #tpu.memory_space<vmem>>, %arg3: memref<32x128xf32, #tpu.memory_space<vmem>>, %arg4: memref<1x128xf32, #tpu.memory_space<vmem>>, %arg5: memref<32x1xf32, #tpu.memory_space<vmem>>, %arg6: memref<1x1xf32, #tpu.memory_space<vmem>>, %arg7: memref<2x1xf32, #tpu.memory_space<vmem>>) attributes {dimension_semantics = [#tpu.dimension_semantics<parallel>], iteration_bounds = array<i64: 1>, scalar_prefetch = 0 : i64, scratch_operands = 0 : i64, tpu.core_type = #tpu.core_type<tc>, window_params = [{transform_indices = @transform_0, window_bounds = array<i64: 2, 8, 1>}, {pipeline_mode = #tpu.pipeline_mode<synchronous>, transform_indices = @transform_1, window_bounds = array<i64: 1, 128>}, {pipeline_mode = #tpu.pipeline_mode<synchronous>, transform_indices = @transform_2, window_bounds = array<i64: 32, 128>}, {pipeline_mode = #tpu.pipeline_mode<synchronous>, transform_indices = @transform_3, window_bounds = array<i64: 1, 128>}, {pipeline_mode = #tpu.pipeline_mode<synchronous>, transform_indices = @transform_4, window_bounds = array<i64: 32, 1>}, {pipeline_mode = #tpu.pipeline_mode<synchronous>, transform_indices = @transform_5, window_bounds = array<i64: 1, 1>}, {transform_indices = @transform_6, window_bounds = array<i64: 2, 1>}]} {
    %c0 = arith.constant 0 : index
    %c0_0 = arith.constant 0 : index
    %0 = vector.load %arg2[%c0, %c0_0] : memref<1x128xf32, #tpu.memory_space<vmem>>, vector<1x128xf32>
    %c0_1 = arith.constant 0 : index
    %c0_2 = arith.constant 0 : index
    %1 = vector.load %arg3[%c0_1, %c0_2] : memref<32x128xf32, #tpu.memory_space<vmem>>, vector<32x128xf32>
    %c0_3 = arith.constant 0 : index
    %c0_4 = arith.constant 0 : index
    %2 = vector.load %arg4[%c0_3, %c0_4] : memref<1x128xf32, #tpu.memory_space<vmem>>, vector<1x128xf32>
    %c0_5 = arith.constant 0 : index
    %c0_6 = arith.constant 0 : index
    %c0_7 = arith.constant 0 : index
    %3 = vector.load %arg1[%c0_5, %c0_6, %c0_7] : memref<2x8x1xf32, #tpu.memory_space<vmem>>, vector<2x8x1xf32>
    %4 = vector.shape_cast %3 : vector<2x8x1xf32> to vector<16x1xf32>
    %cst = arith.constant dense<0.000000e+00> : vector<16x128xf32>
    %5 = tpu.matmul %4, %0, %cst {dimension_numbers = #tpu.dot_dimension_numbers<[1], [0], [0], [1], [0, 0, 1, 1], [], []>} : vector<16x1xf32>, vector<1x128xf32>, vector<16x128xf32> -> vector<16x128xf32>
    %6 = vector.shape_cast %5 : vector<16x128xf32> to vector<2x8x128xf32>
    %7 = vector.shape_cast %2 : vector<1x128xf32> to vector<1x1x128xf32>
    %8 = vector.broadcast %7 : vector<1x1x128xf32> to vector<2x8x128xf32>
    %9 = arith.addf %6, %8 : vector<2x8x128xf32>
    %cst_8 = arith.constant 0.000000e+00 : f32
    %10 = vector.broadcast %cst_8 : f32 to vector<2x32xf32>
    %cst_9 = arith.constant 0.000000e+00 : f32
    %11 = vector.broadcast %cst_9 : f32 to vector<2x32xf32>
    %12 = vector.extract_strided_slice %9 {offsets = [0, 0, 0], sizes = [2, 1, 128], strides = [1, 1, 1]} : vector<2x8x128xf32> to vector<2x1x128xf32>
    %13 = vector.shape_cast %12 : vector<2x1x128xf32> to vector<2x128xf32>
    %cst_10 = arith.constant dense<0.000000e+00> : vector<2x128xf32>
    %14 = tpu.matmul %10, %1, %cst_10 {dimension_numbers = #tpu.dot_dimension_numbers<[1], [0], [0], [1], [0, 0, 1, 1], [], []>} : vector<2x32xf32>, vector<32x128xf32>, vector<2x128xf32> -> vector<2x128xf32>
    %15 = arith.addf %13, %14 : vector<2x128xf32>
    %16 = arith.negf %15 : vector<2x128xf32>
    %17 = math.exp %16 : vector<2x128xf32>
    %cst_11 = arith.constant 1.000000e+00 : f32
    %18 = vector.broadcast %cst_11 : f32 to vector<2x128xf32>
    %19 = arith.addf %18, %17 : vector<2x128xf32>
    %20 = arith.divf %18, %19 : vector<2x128xf32>
    %21 = math.tanh %15 : vector<2x128xf32>
    %22 = vector.extract_strided_slice %20 {offsets = [0, 0], sizes = [2, 32], strides = [1, 1]} : vector<2x128xf32> to vector<2x32xf32>
    %23 = vector.extract_strided_slice %20 {offsets = [0, 32], sizes = [2, 32], strides = [1, 1]} : vector<2x128xf32> to vector<2x32xf32>
    %24 = vector.extract_strided_slice %21 {offsets = [0, 64], sizes = [2, 32], strides = [1, 1]} : vector<2x128xf32> to vector<2x32xf32>
    %25 = vector.extract_strided_slice %20 {offsets = [0, 96], sizes = [2, 32], strides = [1, 1]} : vector<2x128xf32> to vector<2x32xf32>
    %26 = arith.mulf %23, %11 : vector<2x32xf32>
    %27 = arith.mulf %22, %24 : vector<2x32xf32>
    %28 = arith.addf %26, %27 : vector<2x32xf32>
    %29 = math.tanh %28 : vector<2x32xf32>
    %30 = arith.mulf %25, %29 : vector<2x32xf32>
    %31 = vector.extract_strided_slice %9 {offsets = [0, 1, 0], sizes = [2, 1, 128], strides = [1, 1, 1]} : vector<2x8x128xf32> to vector<2x1x128xf32>
    %32 = vector.shape_cast %31 : vector<2x1x128xf32> to vector<2x128xf32>
    %cst_12 = arith.constant dense<0.000000e+00> : vector<2x128xf32>
    %33 = tpu.matmul %30, %1, %cst_12 {dimension_numbers = #tpu.dot_dimension_numbers<[1], [0], [0], [1], [0, 0, 1, 1], [], []>} : vector<2x32xf32>, vector<32x128xf32>, vector<2x128xf32> -> vector<2x128xf32>
    %34 = arith.addf %32, %33 : vector<2x128xf32>
    %35 = arith.negf %34 : vector<2x128xf32>
    %36 = math.exp %35 : vector<2x128xf32>
    %cst_13 = arith.constant 1.000000e+00 : f32
    %37 = vector.broadcast %cst_13 : f32 to vector<2x128xf32>
    %38 = arith.addf %37, %36 : vector<2x128xf32>
    %39 = arith.divf %37, %38 : vector<2x128xf32>
    %40 = math.tanh %34 : vector<2x128xf32>
    %41 = vector.extract_strided_slice %39 {offsets = [0, 0], sizes = [2, 32], strides = [1, 1]} : vector<2x128xf32> to vector<2x32xf32>
    %42 = vector.extract_strided_slice %39 {offsets = [0, 32], sizes = [2, 32], strides = [1, 1]} : vector<2x128xf32> to vector<2x32xf32>
    %43 = vector.extract_strided_slice %40 {offsets = [0, 64], sizes = [2, 32], strides = [1, 1]} : vector<2x128xf32> to vector<2x32xf32>
    %44 = vector.extract_strided_slice %39 {offsets = [0, 96], sizes = [2, 32], strides = [1, 1]} : vector<2x128xf32> to vector<2x32xf32>
    %45 = arith.mulf %42, %28 : vector<2x32xf32>
    %46 = arith.mulf %41, %43 : vector<2x32xf32>
    %47 = arith.addf %45, %46 : vector<2x32xf32>
    %48 = math.tanh %47 : vector<2x32xf32>
    %49 = arith.mulf %44, %48 : vector<2x32xf32>
    %50 = vector.extract_strided_slice %9 {offsets = [0, 2, 0], sizes = [2, 1, 128], strides = [1, 1, 1]} : vector<2x8x128xf32> to vector<2x1x128xf32>
    %51 = vector.shape_cast %50 : vector<2x1x128xf32> to vector<2x128xf32>
    %cst_14 = arith.constant dense<0.000000e+00> : vector<2x128xf32>
    %52 = tpu.matmul %49, %1, %cst_14 {dimension_numbers = #tpu.dot_dimension_numbers<[1], [0], [0], [1], [0, 0, 1, 1], [], []>} : vector<2x32xf32>, vector<32x128xf32>, vector<2x128xf32> -> vector<2x128xf32>
    %53 = arith.addf %51, %52 : vector<2x128xf32>
    %54 = arith.negf %53 : vector<2x128xf32>
    %55 = math.exp %54 : vector<2x128xf32>
    %cst_15 = arith.constant 1.000000e+00 : f32
    %56 = vector.broadcast %cst_15 : f32 to vector<2x128xf32>
    %57 = arith.addf %56, %55 : vector<2x128xf32>
    %58 = arith.divf %56, %57 : vector<2x128xf32>
    %59 = math.tanh %53 : vector<2x128xf32>
    %60 = vector.extract_strided_slice %58 {offsets = [0, 0], sizes = [2, 32], strides = [1, 1]} : vector<2x128xf32> to vector<2x32xf32>
    %61 = vector.extract_strided_slice %58 {offsets = [0, 32], sizes = [2, 32], strides = [1, 1]} : vector<2x128xf32> to vector<2x32xf32>
    %62 = vector.extract_strided_slice %59 {offsets = [0, 64], sizes = [2, 32], strides = [1, 1]} : vector<2x128xf32> to vector<2x32xf32>
    %63 = vector.extract_strided_slice %58 {offsets = [0, 96], sizes = [2, 32], strides = [1, 1]} : vector<2x128xf32> to vector<2x32xf32>
    %64 = arith.mulf %61, %47 : vector<2x32xf32>
    %65 = arith.mulf %60, %62 : vector<2x32xf32>
    %66 = arith.addf %64, %65 : vector<2x32xf32>
    %67 = math.tanh %66 : vector<2x32xf32>
    %68 = arith.mulf %63, %67 : vector<2x32xf32>
    %69 = vector.extract_strided_slice %9 {offsets = [0, 3, 0], sizes = [2, 1, 128], strides = [1, 1, 1]} : vector<2x8x128xf32> to vector<2x1x128xf32>
    %70 = vector.shape_cast %69 : vector<2x1x128xf32> to vector<2x128xf32>
    %cst_16 = arith.constant dense<0.000000e+00> : vector<2x128xf32>
    %71 = tpu.matmul %68, %1, %cst_16 {dimension_numbers = #tpu.dot_dimension_numbers<[1], [0], [0], [1], [0, 0, 1, 1], [], []>} : vector<2x32xf32>, vector<32x128xf32>, vector<2x128xf32> -> vector<2x128xf32>
    %72 = arith.addf %70, %71 : vector<2x128xf32>
    %73 = arith.negf %72 : vector<2x128xf32>
    %74 = math.exp %73 : vector<2x128xf32>
    %cst_17 = arith.constant 1.000000e+00 : f32
    %75 = vector.broadcast %cst_17 : f32 to vector<2x128xf32>
    %76 = arith.addf %75, %74 : vector<2x128xf32>
    %77 = arith.divf %75, %76 : vector<2x128xf32>
    %78 = math.tanh %72 : vector<2x128xf32>
    %79 = vector.extract_strided_slice %77 {offsets = [0, 0], sizes = [2, 32], strides = [1, 1]} : vector<2x128xf32> to vector<2x32xf32>
    %80 = vector.extract_strided_slice %77 {offsets = [0, 32], sizes = [2, 32], strides = [1, 1]} : vector<2x128xf32> to vector<2x32xf32>
    %81 = vector.extract_strided_slice %78 {offsets = [0, 64], sizes = [2, 32], strides = [1, 1]} : vector<2x128xf32> to vector<2x32xf32>
    %82 = vector.extract_strided_slice %77 {offsets = [0, 96], sizes = [2, 32], strides = [1, 1]} : vector<2x128xf32> to vector<2x32xf32>
    %83 = arith.mulf %80, %66 : vector<2x32xf32>
    %84 = arith.mulf %79, %81 : vector<2x32xf32>
    %85 = arith.addf %83, %84 : vector<2x32xf32>
    %86 = math.tanh %85 : vector<2x32xf32>
    %87 = arith.mulf %82, %86 : vector<2x32xf32>
    %88 = vector.extract_strided_slice %9 {offsets = [0, 4, 0], sizes = [2, 1, 128], strides = [1, 1, 1]} : vector<2x8x128xf32> to vector<2x1x128xf32>
    %89 = vector.shape_cast %88 : vector<2x1x128xf32> to vector<2x128xf32>
    %cst_18 = arith.constant dense<0.000000e+00> : vector<2x128xf32>
    %90 = tpu.matmul %87, %1, %cst_18 {dimension_numbers = #tpu.dot_dimension_numbers<[1], [0], [0], [1], [0, 0, 1, 1], [], []>} : vector<2x32xf32>, vector<32x128xf32>, vector<2x128xf32> -> vector<2x128xf32>
    %91 = arith.addf %89, %90 : vector<2x128xf32>
    %92 = arith.negf %91 : vector<2x128xf32>
    %93 = math.exp %92 : vector<2x128xf32>
    %cst_19 = arith.constant 1.000000e+00 : f32
    %94 = vector.broadcast %cst_19 : f32 to vector<2x128xf32>
    %95 = arith.addf %94, %93 : vector<2x128xf32>
    %96 = arith.divf %94, %95 : vector<2x128xf32>
    %97 = math.tanh %91 : vector<2x128xf32>
    %98 = vector.extract_strided_slice %96 {offsets = [0, 0], sizes = [2, 32], strides = [1, 1]} : vector<2x128xf32> to vector<2x32xf32>
    %99 = vector.extract_strided_slice %96 {offsets = [0, 32], sizes = [2, 32], strides = [1, 1]} : vector<2x128xf32> to vector<2x32xf32>
    %100 = vector.extract_strided_slice %97 {offsets = [0, 64], sizes = [2, 32], strides = [1, 1]} : vector<2x128xf32> to vector<2x32xf32>
    %101 = vector.extract_strided_slice %96 {offsets = [0, 96], sizes = [2, 32], strides = [1, 1]} : vector<2x128xf32> to vector<2x32xf32>
    %102 = arith.mulf %99, %85 : vector<2x32xf32>
    %103 = arith.mulf %98, %100 : vector<2x32xf32>
    %104 = arith.addf %102, %103 : vector<2x32xf32>
    %105 = math.tanh %104 : vector<2x32xf32>
    %106 = arith.mulf %101, %105 : vector<2x32xf32>
    %107 = vector.extract_strided_slice %9 {offsets = [0, 5, 0], sizes = [2, 1, 128], strides = [1, 1, 1]} : vector<2x8x128xf32> to vector<2x1x128xf32>
    %108 = vector.shape_cast %107 : vector<2x1x128xf32> to vector<2x128xf32>
    %cst_20 = arith.constant dense<0.000000e+00> : vector<2x128xf32>
    %109 = tpu.matmul %106, %1, %cst_20 {dimension_numbers = #tpu.dot_dimension_numbers<[1], [0], [0], [1], [0, 0, 1, 1], [], []>} : vector<2x32xf32>, vector<32x128xf32>, vector<2x128xf32> -> vector<2x128xf32>
    %110 = arith.addf %108, %109 : vector<2x128xf32>
    %111 = arith.negf %110 : vector<2x128xf32>
    %112 = math.exp %111 : vector<2x128xf32>
    %cst_21 = arith.constant 1.000000e+00 : f32
    %113 = vector.broadcast %cst_21 : f32 to vector<2x128xf32>
    %114 = arith.addf %113, %112 : vector<2x128xf32>
    %115 = arith.divf %113, %114 : vector<2x128xf32>
    %116 = math.tanh %110 : vector<2x128xf32>
    %117 = vector.extract_strided_slice %115 {offsets = [0, 0], sizes = [2, 32], strides = [1, 1]} : vector<2x128xf32> to vector<2x32xf32>
    %118 = vector.extract_strided_slice %115 {offsets = [0, 32], sizes = [2, 32], strides = [1, 1]} : vector<2x128xf32> to vector<2x32xf32>
    %119 = vector.extract_strided_slice %116 {offsets = [0, 64], sizes = [2, 32], strides = [1, 1]} : vector<2x128xf32> to vector<2x32xf32>
    %120 = vector.extract_strided_slice %115 {offsets = [0, 96], sizes = [2, 32], strides = [1, 1]} : vector<2x128xf32> to vector<2x32xf32>
    %121 = arith.mulf %118, %104 : vector<2x32xf32>
    %122 = arith.mulf %117, %119 : vector<2x32xf32>
    %123 = arith.addf %121, %122 : vector<2x32xf32>
    %124 = math.tanh %123 : vector<2x32xf32>
    %125 = arith.mulf %120, %124 : vector<2x32xf32>
    %126 = vector.extract_strided_slice %9 {offsets = [0, 6, 0], sizes = [2, 1, 128], strides = [1, 1, 1]} : vector<2x8x128xf32> to vector<2x1x128xf32>
    %127 = vector.shape_cast %126 : vector<2x1x128xf32> to vector<2x128xf32>
    %cst_22 = arith.constant dense<0.000000e+00> : vector<2x128xf32>
    %128 = tpu.matmul %125, %1, %cst_22 {dimension_numbers = #tpu.dot_dimension_numbers<[1], [0], [0], [1], [0, 0, 1, 1], [], []>} : vector<2x32xf32>, vector<32x128xf32>, vector<2x128xf32> -> vector<2x128xf32>
    %129 = arith.addf %127, %128 : vector<2x128xf32>
    %130 = arith.negf %129 : vector<2x128xf32>
    %131 = math.exp %130 : vector<2x128xf32>
    %cst_23 = arith.constant 1.000000e+00 : f32
    %132 = vector.broadcast %cst_23 : f32 to vector<2x128xf32>
    %133 = arith.addf %132, %131 : vector<2x128xf32>
    %134 = arith.divf %132, %133 : vector<2x128xf32>
    %135 = math.tanh %129 : vector<2x128xf32>
    %136 = vector.extract_strided_slice %134 {offsets = [0, 0], sizes = [2, 32], strides = [1, 1]} : vector<2x128xf32> to vector<2x32xf32>
    %137 = vector.extract_strided_slice %134 {offsets = [0, 32], sizes = [2, 32], strides = [1, 1]} : vector<2x128xf32> to vector<2x32xf32>
    %138 = vector.extract_strided_slice %135 {offsets = [0, 64], sizes = [2, 32], strides = [1, 1]} : vector<2x128xf32> to vector<2x32xf32>
    %139 = vector.extract_strided_slice %134 {offsets = [0, 96], sizes = [2, 32], strides = [1, 1]} : vector<2x128xf32> to vector<2x32xf32>
    %140 = arith.mulf %137, %123 : vector<2x32xf32>
    %141 = arith.mulf %136, %138 : vector<2x32xf32>
    %142 = arith.addf %140, %141 : vector<2x32xf32>
    %143 = math.tanh %142 : vector<2x32xf32>
    %144 = arith.mulf %139, %143 : vector<2x32xf32>
    %145 = vector.extract_strided_slice %9 {offsets = [0, 7, 0], sizes = [2, 1, 128], strides = [1, 1, 1]} : vector<2x8x128xf32> to vector<2x1x128xf32>
    %146 = vector.shape_cast %145 : vector<2x1x128xf32> to vector<2x128xf32>
    %cst_24 = arith.constant dense<0.000000e+00> : vector<2x128xf32>
    %147 = tpu.matmul %144, %1, %cst_24 {dimension_numbers = #tpu.dot_dimension_numbers<[1], [0], [0], [1], [0, 0, 1, 1], [], []>} : vector<2x32xf32>, vector<32x128xf32>, vector<2x128xf32> -> vector<2x128xf32>
    %148 = arith.addf %146, %147 : vector<2x128xf32>
    %149 = arith.negf %148 : vector<2x128xf32>
    %150 = math.exp %149 : vector<2x128xf32>
    %cst_25 = arith.constant 1.000000e+00 : f32
    %151 = vector.broadcast %cst_25 : f32 to vector<2x128xf32>
    %152 = arith.addf %151, %150 : vector<2x128xf32>
    %153 = arith.divf %151, %152 : vector<2x128xf32>
    %154 = math.tanh %148 : vector<2x128xf32>
    %155 = vector.extract_strided_slice %153 {offsets = [0, 0], sizes = [2, 32], strides = [1, 1]} : vector<2x128xf32> to vector<2x32xf32>
    %156 = vector.extract_strided_slice %153 {offsets = [0, 32], sizes = [2, 32], strides = [1, 1]} : vector<2x128xf32> to vector<2x32xf32>
    %157 = vector.extract_strided_slice %154 {offsets = [0, 64], sizes = [2, 32], strides = [1, 1]} : vector<2x128xf32> to vector<2x32xf32>
    %158 = vector.extract_strided_slice %153 {offsets = [0, 96], sizes = [2, 32], strides = [1, 1]} : vector<2x128xf32> to vector<2x32xf32>
    %159 = arith.mulf %156, %142 : vector<2x32xf32>
    %160 = arith.mulf %155, %157 : vector<2x32xf32>
    %161 = arith.addf %159, %160 : vector<2x32xf32>
    %162 = math.tanh %161 : vector<2x32xf32>
    %163 = arith.mulf %158, %162 : vector<2x32xf32>
    %c0_26 = arith.constant 0 : index
    %c0_27 = arith.constant 0 : index
    %164 = vector.load %arg5[%c0_26, %c0_27] : memref<32x1xf32, #tpu.memory_space<vmem>>, vector<32x1xf32>
    %c0_28 = arith.constant 0 : index
    %c0_29 = arith.constant 0 : index
    %165 = vector.load %arg6[%c0_28, %c0_29] : memref<1x1xf32, #tpu.memory_space<vmem>>, vector<1x1xf32>
    %166 = vector.shape_cast %164 : vector<32x1xf32> to vector<32xf32>
    %167 = vector.shape_cast %166 : vector<32xf32> to vector<1x32xf32>
    %168 = vector.broadcast %167 : vector<1x32xf32> to vector<2x32xf32>
    %169 = arith.mulf %163, %168 : vector<2x32xf32>
    %cst_30 = arith.constant dense<0.000000e+00> : vector<2xf32>
    %170 = vector.multi_reduction <add>, %169, %cst_30 [1] : vector<2x32xf32> to vector<2xf32>
    %171 = vector.shape_cast %170 : vector<2xf32> to vector<2x1xf32>
    %172 = vector.broadcast %165 : vector<1x1xf32> to vector<2x1xf32>
    %173 = arith.addf %171, %172 : vector<2x1xf32>
    %c0_31 = arith.constant 0 : index
    %c0_32 = arith.constant 0 : index
    %174 = vector.load %arg7[%c0_31, %c0_32] : memref<2x1xf32, #tpu.memory_space<vmem>>, vector<2x1xf32>
    tpu.vector_store %arg7[%c0_31, %c0_32], %173 {strides = array<i32>} : memref<2x1xf32, #tpu.memory_space<vmem>>, vector<2x1xf32>,
    return
  }
  func.func @transform_0(%arg0: i32) -> (i32, i32, i32) {
    %c0_i32 = arith.constant 0 : i32
    %c0_i32_0 = arith.constant 0 : i32
    %c0_i32_1 = arith.constant 0 : i32
    return %arg0, %c0_i32, %c0_i32_0 : i32, i32, i32
  }
  func.func @transform_1(%arg0: i32) -> (i32, i32) {
    %c0_i32 = arith.constant 0 : i32
    %c0_i32_0 = arith.constant 0 : i32
    %c0_i32_1 = arith.constant 0 : i32
    return %c0_i32, %c0_i32_0 : i32, i32
  }
  func.func @transform_2(%arg0: i32) -> (i32, i32) {
    %c0_i32 = arith.constant 0 : i32
    %c0_i32_0 = arith.constant 0 : i32
    %c0_i32_1 = arith.constant 0 : i32
    return %c0_i32, %c0_i32_0 : i32, i32
  }
  func.func @transform_3(%arg0: i32) -> (i32, i32) {
    %c0_i32 = arith.constant 0 : i32
    %c0_i32_0 = arith.constant 0 : i32
    %c0_i32_1 = arith.constant 0 : i32
    return %c0_i32, %c0_i32_0 : i32, i32
  }
  func.func @transform_4(%arg0: i32) -> (i32, i32) {
    %c0_i32 = arith.constant 0 : i32
    %c0_i32_0 = arith.constant 0 : i32
    %c0_i32_1 = arith.constant 0 : i32
    return %c0_i32, %c0_i32_0 : i32, i32
  }
  func.func @transform_5(%arg0: i32) -> (i32, i32) {
    %c0_i32 = arith.constant 0 : i32
    %c0_i32_0 = arith.constant 0 : i32
    %c0_i32_1 = arith.constant 0 : i32
    return %c0_i32, %c0_i32_0 : i32, i32
  }
  func.func @transform_6(%arg0: i32) -> (i32, i32) {
    %c0_i32 = arith.constant 0 : i32
    %c0_i32_0 = arith.constant 0 : i32
    return %arg0, %c0_i32 : i32, i32
  }
}

</mosaic_0001>

<llo_original>
// kernel: tpu_custom_call.1
$region0: #{tpu_custom_call.1}
  #allocation0 [shape = 'u32[]', space=smem, size = 0x4, offset = 0x4, fixed_abs, tag = 'smem constant byte address 0x4 - core index']
  #allocation1 [shape = 'u32[72,128]{1,0:T(1,128)}', space=vmem, size = 0x9000, scoped, tag = 'internal scratch']
  #allocation2 [shape = 'f32[1,1]{1,0:T(1,128)S(1)}', space=vmem, size = 0x200, scoped, tag = 'scoped memory for tpu_custom_call.1']
  %s0 = inlined_call_operand.vmem [shape: f32[2,8,1], index: 0, kind: input, shape index: {}]
  %s1 = inlined_call_operand.vmem [shape: f32[1,128], index: 1, kind: input, shape index: {}]
  %s2 = inlined_call_operand.vmem [shape: f32[32,128], index: 2, kind: input, shape index: {}]
  %s3 = inlined_call_operand.vmem [shape: f32[1,128], index: 3, kind: input, shape index: {}]
  %s4 = inlined_call_operand.vmem [shape: f32[32,1], index: 4, kind: input, shape index: {}]
  %s5 = inlined_call_operand.<no memory space> [shape: f32[1,1], index: 5, kind: input, shape index: {}]
  %s6 = inlined_call_operand.vmem [shape: f32[2,1], index: 6, kind: output, shape index: {}]
  %s7 = sld [smem:[#allocation0]]
  $region34: #{tpu_custom_call.1} parent=0
    _
  %s9 = ssub.s32 1, %s7
  %s10 = scalar_select 0, %s9, %s7
  %v11 = vstv %s5
  %12 = vst [vmem:[#allocation2] sm:$0x1] %v11
  // Predicated region
  $region2: #{tpu_custom_call.1} parent=0 // pred_check
    _
  $region3: #{tpu_custom_call.1} parent=0 // pred_check_branch
    %14 = sbr.rel (0) target = $region5
  $region4: #{tpu_custom_call.1} parent=0 // pred_region
    _
  $region5: #{tpu_custom_call.1} parent=0 // pred_fallthru
    _
  // Predicated region
  $region6: #{tpu_custom_call.1} parent=0 // pred_check
    _
  $region7: #{tpu_custom_call.1} parent=0 // pred_check_branch
    %16 = sbr.rel (0) target = $region9
  $region8: #{tpu_custom_call.1} parent=0 // pred_region
    _
  $region9: #{tpu_custom_call.1} parent=0 // pred_fallthru
    _
  // Predicated region
  $region10: #{tpu_custom_call.1} parent=0 // pred_check
    _
  $region11: #{tpu_custom_call.1} parent=0 // pred_check_branch
    %18 = sbr.rel (0) target = $region13
  $region12: #{tpu_custom_call.1} parent=0 // pred_region
    _
  $region13: #{tpu_custom_call.1} parent=0 // pred_fallthru
    _
  // Predicated region
  $region14: #{tpu_custom_call.1} parent=0 // pred_check
    _
  $region15: #{tpu_custom_call.1} parent=0 // pred_check_branch
    %20 = sbr.rel (0) target = $region17
  $region16: #{tpu_custom_call.1} parent=0 // pred_region
    _
  $region17: #{tpu_custom_call.1} parent=0 // pred_fallthru
    _
  // Predicated region
  $region18: #{tpu_custom_call.1} parent=0 // pred_check
    _
  $region19: #{tpu_custom_call.1} parent=0 // pred_check_branch
    %22 = sbr.rel (0) target = $region21
  $region20: #{tpu_custom_call.1} parent=0 // pred_region
    _
  $region21: #{tpu_custom_call.1} parent=0 // pred_fallthru
    _
  // Predicated region
  $region22: #{tpu_custom_call.1} parent=0 // pred_check
    _
  $region23: #{tpu_custom_call.1} parent=0 // pred_check_branch
    %24 = sbr.rel (0) target = $region25
  $region24: #{tpu_custom_call.1} parent=0 // pred_region
    _
  $region25: #{tpu_custom_call.1} parent=0 // pred_fallthru
    _
  %v25 = vld [vmem:[%s1] sm:$0x1]
  %v26 = vld [vmem:[%s2] sm:$0xff]
  %v27 = vld [vmem:[%s2 + $0x8] sm:$0xff]
  %v28 = vld [vmem:[%s2 + $0x10] sm:$0xff]
  %v29 = vld [vmem:[%s2 + $0x18] sm:$0xff]
  %v30 = vld [vmem:[%s3] sm:$0x1]
  %v31 = vld [vmem:[%s0] sm:$0xff]
  %v32 = vld [vmem:[%s0 + $0x8] sm:$0xff]
  %vm33 = vcmask 7168
  %v35 = vsel %vm33, %v31, 0
  %v38 = vsel %vm33, %v32, 0
  %vm40 = vcmask 1040384
  %v42 = vsel %vm40, %v25, 0
  %44 = vmatpush.msra.mxu0 0.0
  %45 = vmatpush.msra.mxu0 0.0
  %46 = vmatpush.msra.mxu0 0.0
  %47 = vmatpush.msra.mxu0 0.0
  %48 = vmatpush.msra.mxu0 0.0
  %49 = vmatpush.msra.mxu0 0.0
  %50 = vmatpush.msra.mxu0 0.0
  %51 = vmatpush.msra.mxu0 0.0
  %52 = vmatpush.msra.mxu0 0.0
  %53 = vmatpush.msra.mxu0 0.0
  %54 = vmatpush.msra.mxu0 0.0
  %55 = vmatpush.msra.mxu0 0.0
  %56 = vmatpush.msra.mxu0 0.0
  %57 = vmatpush.msra.mxu0 0.0
  %58 = vmatpush.msra.mxu0 0.0
  %59 = vmatpush.msra.mxu0 %v42
  %60 = vmatmul.f32.gmra.mxu0 %v35
  %v61 = vpop.f32.mrf.mxu0
  %v62 = vadd.f32 0.0, %v61
  %63 = vmatmul.f32.gmra.mxu0 %v38
  %v64 = vpop.f32.mrf.mxu0
  %v65 = vadd.f32 0.0, %v64
  %66 = vdwg.mxu0
  %v68 = vperm.slane %v30, 0
  %v70 = vadd.f32 %v62, %v68
  %v71 = vadd.f32 %v65, %v68
  %vm72 = vcmask 261120
  %v74 = vsel %vm72, 0.0, 0
  %76 = vmatpush.msra.mxu0 0.0
  %77 = vmatpush.msra.mxu0 0.0
  %78 = vmatpush.msra.mxu0 0.0
  %79 = vmatpush.msra.mxu0 0.0
  %80 = vmatpush.msra.mxu0 0.0
  %81 = vmatpush.msra.mxu0 0.0
  %82 = vmatpush.msra.mxu0 0.0
  %83 = vmatpush.msra.mxu0 0.0
  %84 = vmatpush.msra.mxu0 0.0
  %85 = vmatpush.msra.mxu0 0.0
  %86 = vmatpush.msra.mxu0 0.0
  %87 = vmatpush.msra.mxu0 0.0
  %88 = vmatpush.msra.mxu0 %v29
  %89 = vmatpush.msra.mxu0 %v28
  %90 = vmatpush.msra.mxu0 %v27
  %91 = vmatpush.msra.mxu0 %v26
  %92 = vmatmul.f32.gmra.mxu0 %v74
  %v93 = vpop.f32.mrf.mxu0
  %v94 = vadd.f32 0.0, %v93
  %95 = vdwg.mxu0
  %v97 = vrot.slane %v94, 1
  %v100 = vadd.f32 %v70, %v94
  %v101 = vadd.f32 %v71, %v97
  %v102 = vxor.u32 %v100, 2147483648
  %v103 = vxor.u32 %v101, 2147483648
  %v104 = vmul.f32 %v102, 1.442695
  %v105 = vpow.pop %v104
  %v106 = vmul.f32 %v103, 1.442695
  %v107 = vpow.pop %v106
  %v108 = vadd.f32 %v105, 1.0
  %v109 = vadd.f32 %v107, 1.0
  %v110 = vrcp.pop %v108
  %v111 = vmul.f32 %v108, %v110
  %v112 = vsub.f32 1.0, %v111
  %v113 = vmul.f32 %v110, %v112
  %v114 = vadd.f32 %v110, %v113
  %vm115 = vweird.f32 %v108
  %vm116 = vweird.f32 %v110
  %vm117 = vmor %vm115, %vm116
  %v118 = vsel %vm117, %v110, %v114
  %v119 = vand.u32 2147483647, %v108
  %vm120 = vcmp.eq.f32.partialorder %v119, 8.507059e+37
  %v121 = vand.u32 %v108, 2147483648
  %v122 = vor.u32 1.1754944e-38, %v121
  %v123 = vsel %vm120, %v122, %v118
  %v124 = vmul.f32 1.0, %v123
  %v125 = vrcp.pop %v109
  %v126 = vmul.f32 %v109, %v125
  %v127 = vsub.f32 1.0, %v126
  %v128 = vmul.f32 %v125, %v127
  %v129 = vadd.f32 %v125, %v128
  %vm130 = vweird.f32 %v109
  %vm131 = vweird.f32 %v125
  %vm132 = vmor %vm130, %vm131
  %v133 = vsel %vm132, %v125, %v129
  %v134 = vand.u32 2147483647, %v109
  %vm135 = vcmp.eq.f32.partialorder %v134, 8.507059e+37
  %v136 = vand.u32 %v109, 2147483648
  %v137 = vor.u32 1.1754944e-38, %v136
  %v138 = vsel %vm135, %v137, %v133
  %v139 = vmul.f32 1.0, %v138
  %v140 = vtanh.pop %v100
  %v141 = vtanh.pop %v101
  %v142 = vmul.f32 %v124, 0.0
  %v143 = vmul.f32 %v139, 0.0
  %146 = vrot.lane.b32.xlu0 %v140, 64
  %v147 = vpop.permute.xlu0 %146
  %148 = vrot.lane.b32.xlu0 %v141, 64
  %v149 = vpop.permute.xlu0 %148
  %v152 = vmul.f32 %v124, %v147
  %v153 = vmul.f32 %v139, %v149
  %156 = vrot.lane.b32.xlu0 %v152, 32
  %v157 = vpop.permute.xlu0 %156
  %158 = vrot.lane.b32.xlu0 %v153, 32
  %v159 = vpop.permute.xlu0 %158
  %v162 = vadd.f32 %v142, %v157
  %v163 = vadd.f32 %v143, %v159
  %v164 = vtanh.pop %v162
  %v165 = vtanh.pop %v163
  %168 = vrot.lane.b32.xlu0 %v164, 64
  %v169 = vpop.permute.xlu0 %168
  %170 = vrot.lane.b32.xlu0 %v165, 64
  %v171 = vpop.permute.xlu0 %170
  %v174 = vmul.f32 %v124, %v169
  %v175 = vmul.f32 %v139, %v171
  %v178 = vrot.slane %v175, 7
  %vm179 = vcmask 1041409
  %v180 = vsel %vm179, %v178, %v174
  %181 = vrot.lane.b32.xlu0 %v180, 32
  %v182 = vpop.permute.xlu0 %181
  %v183 = vsel %vm72, %v182, 0
  %185 = vmatpush.msra.mxu0 0.0
  %186 = vmatpush.msra.mxu0 0.0
  %187 = vmatpush.msra.mxu0 0.0
  %188 = vmatpush.msra.mxu0 0.0
  %189 = vmatpush.msra.mxu0 0.0
  %190 = vmatpush.msra.mxu0 0.0
  %191 = vmatpush.msra.mxu0 0.0
  %192 = vmatpush.msra.mxu0 0.0
  %193 = vmatpush.msra.mxu0 0.0
  %194 = vmatpush.msra.mxu0 0.0
  %195 = vmatpush.msra.mxu0 0.0
  %196 = vmatpush.msra.mxu0 0.0
  %197 = vmatpush.msra.mxu0 %v29
  %198 = vmatpush.msra.mxu0 %v28
  %199 = vmatpush.msra.mxu0 %v27
  %200 = vmatpush.msra.mxu0 %v26
  %201 = vmatmul.f32.gmra.mxu0 %v183
  %v202 = vpop.f32.mrf.mxu0
  %v203 = vadd.f32 0.0, %v202
  %204 = vdwg.mxu0
  %v206 = vrot.slane %v203, 7
  %v209 = vadd.f32 %v70, %v206
  %v210 = vadd.f32 %v71, %v203
  %v211 = vxor.u32 %v209, 2147483648
  %v212 = vxor.u32 %v210, 2147483648
  %v213 = vmul.f32 %v211, 1.442695
  %v214 = vpow.pop %v213
  %v215 = vmul.f32 %v212, 1.442695
  %v216 = vpow.pop %v215
  %v217 = vadd.f32 %v214, 1.0
  %v218 = vadd.f32 %v216, 1.0
  %v219 = vrcp.pop %v217
  %v220 = vmul.f32 %v217, %v219
  %v221 = vsub.f32 1.0, %v220
  %v222 = vmul.f32 %v219, %v221
  %v223 = vadd.f32 %v219, %v222
  %vm224 = vweird.f32 %v217
  %vm225 = vweird.f32 %v219
  %vm226 = vmor %vm224, %vm225
  %v227 = vsel %vm226, %v219, %v223
  %v228 = vand.u32 2147483647, %v217
  %vm229 = vcmp.eq.f32.partialorder %v228, 8.507059e+37
  %v230 = vand.u32 %v217, 2147483648
  %v231 = vor.u32 1.1754944e-38, %v230
  %v232 = vsel %vm229, %v231, %v227
  %v233 = vmul.f32 1.0, %v232
  %v234 = vrcp.pop %v218
  %v235 = vmul.f32 %v218, %v234
  %v236 = vsub.f32 1.0, %v235
  %v237 = vmul.f32 %v234, %v236
  %v238 = vadd.f32 %v234, %v237
  %vm239 = vweird.f32 %v218
  %vm240 = vweird.f32 %v234
  %vm241 = vmor %vm239, %vm240
  %v242 = vsel %vm241, %v234, %v238
  %v243 = vand.u32 2147483647, %v218
  %vm244 = vcmp.eq.f32.partialorder %v243, 8.507059e+37
  %v245 = vand.u32 %v218, 2147483648
  %v246 = vor.u32 1.1754944e-38, %v245
  %v247 = vsel %vm244, %v246, %v242
  %v248 = vmul.f32 1.0, %v247
  %v249 = vtanh.pop %v209
  %v250 = vtanh.pop %v210
  %v253 = vrot.slane %v162, 7
  %v254 = vrot.slane %v163, 7
  %v257 = vmul.f32 %v233, %v253
  %v258 = vmul.f32 %v248, %v254
  %261 = vrot.lane.b32.xlu0 %v249, 64
  %v262 = vpop.permute.xlu0 %261
  %263 = vrot.lane.b32.xlu0 %v250, 64
  %v264 = vpop.permute.xlu0 %263
  %v267 = vmul.f32 %v233, %v262
  %v268 = vmul.f32 %v248, %v264
  %271 = vrot.lane.b32.xlu0 %v267, 32
  %v272 = vpop.permute.xlu0 %271
  %273 = vrot.lane.b32.xlu0 %v268, 32
  %v274 = vpop.permute.xlu0 %273
  %v277 = vadd.f32 %v257, %v272
  %v278 = vadd.f32 %v258, %v274
  %v279 = vtanh.pop %v277
  %v280 = vtanh.pop %v278
  %283 = vrot.lane.b32.xlu0 %v279, 64
  %v284 = vpop.permute.xlu0 %283
  %285 = vrot.lane.b32.xlu0 %v280, 64
  %v286 = vpop.permute.xlu0 %285
  %v289 = vmul.f32 %v233, %v284
  %v290 = vmul.f32 %v248, %v286
  %v293 = vrot.slane %v289, 1
  %v294 = vsel %vm179, %v290, %v293
  %295 = vrot.lane.b32.xlu0 %v294, 32
  %v296 = vpop.permute.xlu0 %295
  %v297 = vsel %vm72, %v296, 0
  %299 = vmatpush.msra.mxu0 0.0
  %300 = vmatpush.msra.mxu0 0.0
  %301 = vmatpush.msra.mxu0 0.0
  %302 = vmatpush.msra.mxu0 0.0
  %303 = vmatpush.msra.mxu0 0.0
  %304 = vmatpush.msra.mxu0 0.0
  %305 = vmatpush.msra.mxu0 0.0
  %306 = vmatpush.msra.mxu0 0.0
  %307 = vmatpush.msra.mxu0 0.0
  %308 = vmatpush.msra.mxu0 0.0
  %309 = vmatpush.msra.mxu0 0.0
  %310 = vmatpush.msra.mxu0 0.0
  %311 = vmatpush.msra.mxu0 %v29
  %312 = vmatpush.msra.mxu0 %v28
  %313 = vmatpush.msra.mxu0 %v27
  %314 = vmatpush.msra.mxu0 %v26
  %315 = vmatmul.f32.gmra.mxu0 %v297
  %v316 = vpop.f32.mrf.mxu0
  %v317 = vadd.f32 0.0, %v316
  %318 = vdwg.mxu0
  %v320 = vrot.slane %v317, 6
  %v321 = vrot.slane %v317, 7
  %v324 = vadd.f32 %v70, %v320
  %v325 = vadd.f32 %v71, %v321
  %v326 = vxor.u32 %v324, 2147483648
  %v327 = vxor.u32 %v325, 2147483648
  %v328 = vmul.f32 %v326, 1.442695
  %v329 = vpow.pop %v328
  %v330 = vmul.f32 %v327, 1.442695
  %v331 = vpow.pop %v330
  %v332 = vadd.f32 %v329, 1.0
  %v333 = vadd.f32 %v331, 1.0
  %v334 = vrcp.pop %v332
  %v335 = vmul.f32 %v332, %v334
  %v336 = vsub.f32 1.0, %v335
  %v337 = vmul.f32 %v334, %v336
  %v338 = vadd.f32 %v334, %v337
  %vm339 = vweird.f32 %v332
  %vm340 = vweird.f32 %v334
  %vm341 = vmor %vm339, %vm340
  %v342 = vsel %vm341, %v334, %v338
  %v343 = vand.u32 2147483647, %v332
  %vm344 = vcmp.eq.f32.partialorder %v343, 8.507059e+37
  %v345 = vand.u32 %v332, 2147483648
  %v346 = vor.u32 1.1754944e-38, %v345
  %v347 = vsel %vm344, %v346, %v342
  %v348 = vmul.f32 1.0, %v347
  %v349 = vrcp.pop %v333
  %v350 = vmul.f32 %v333, %v349
  %v351 = vsub.f32 1.0, %v350
  %v352 = vmul.f32 %v349, %v351
  %v353 = vadd.f32 %v349, %v352
  %vm354 = vweird.f32 %v333
  %vm355 = vweird.f32 %v349
  %vm356 = vmor %vm354, %vm355
  %v357 = vsel %vm356, %v349, %v353
  %v358 = vand.u32 2147483647, %v333
  %vm359 = vcmp.eq.f32.partialorder %v358, 8.507059e+37
  %v360 = vand.u32 %v333, 2147483648
  %v361 = vor.u32 1.1754944e-38, %v360
  %v362 = vsel %vm359, %v361, %v357
  %v363 = vmul.f32 1.0, %v362
  %v364 = vtanh.pop %v324
  %v365 = vtanh.pop %v325
  %v368 = vrot.slane %v277, 7
  %v369 = vrot.slane %v278, 7
  %v372 = vmul.f32 %v348, %v368
  %v373 = vmul.f32 %v363, %v369
  %376 = vrot.lane.b32.xlu0 %v364, 64
  %v377 = vpop.permute.xlu0 %376
  %378 = vrot.lane.b32.xlu0 %v365, 64
  %v379 = vpop.permute.xlu0 %378
  %v382 = vmul.f32 %v348, %v377
  %v383 = vmul.f32 %v363, %v379
  %386 = vrot.lane.b32.xlu0 %v382, 32
  %v387 = vpop.permute.xlu0 %386
  %388 = vrot.lane.b32.xlu0 %v383, 32
  %v389 = vpop.permute.xlu0 %388
  %v392 = vadd.f32 %v372, %v387
  %v393 = vadd.f32 %v373, %v389
  %v394 = vtanh.pop %v392
  %v395 = vtanh.pop %v393
  %398 = vrot.lane.b32.xlu0 %v394, 64
  %v399 = vpop.permute.xlu0 %398
  %400 = vrot.lane.b32.xlu0 %v395, 64
  %v401 = vpop.permute.xlu0 %400
  %v404 = vmul.f32 %v348, %v399
  %v405 = vmul.f32 %v363, %v401
  %v408 = vrot.slane %v404, 2
  %v409 = vrot.slane %v405, 1
  %v410 = vsel %vm179, %v409, %v408
  %411 = vrot.lane.b32.xlu0 %v410, 32
  %v412 = vpop.permute.xlu0 %411
  %v413 = vsel %vm72, %v412, 0
  %415 = vmatpush.msra.mxu0 0.0
  %416 = vmatpush.msra.mxu0 0.0
  %417 = vmatpush.msra.mxu0 0.0
  %418 = vmatpush.msra.mxu0 0.0
  %419 = vmatpush.msra.mxu0 0.0
  %420 = vmatpush.msra.mxu0 0.0
  %421 = vmatpush.msra.mxu0 0.0
  %422 = vmatpush.msra.mxu0 0.0
  %423 = vmatpush.msra.mxu0 0.0
  %424 = vmatpush.msra.mxu0 0.0
  %425 = vmatpush.msra.mxu0 0.0
  %426 = vmatpush.msra.mxu0 0.0
  %427 = vmatpush.msra.mxu0 %v29
  %428 = vmatpush.msra.mxu0 %v28
  %429 = vmatpush.msra.mxu0 %v27
  %430 = vmatpush.msra.mxu0 %v26
  %431 = vmatmul.f32.gmra.mxu0 %v413
  %v432 = vpop.f32.mrf.mxu0
  %v433 = vadd.f32 0.0, %v432
  %434 = vdwg.mxu0
  %v436 = vrot.slane %v433, 5
  %v437 = vrot.slane %v433, 6
  %v440 = vadd.f32 %v70, %v436
  %v441 = vadd.f32 %v71, %v437
  %v442 = vxor.u32 %v440, 2147483648
  %v443 = vxor.u32 %v441, 2147483648
  %v444 = vmul.f32 %v442, 1.442695
  %v445 = vpow.pop %v444
  %v446 = vmul.f32 %v443, 1.442695
  %v447 = vpow.pop %v446
  %v448 = vadd.f32 %v445, 1.0
  %v449 = vadd.f32 %v447, 1.0
  %v450 = vrcp.pop %v448
  %v451 = vmul.f32 %v448, %v450
  %v452 = vsub.f32 1.0, %v451
  %v453 = vmul.f32 %v450, %v452
  %v454 = vadd.f32 %v450, %v453
  %vm455 = vweird.f32 %v448
  %vm456 = vweird.f32 %v450
  %vm457 = vmor %vm455, %vm456
  %v458 = vsel %vm457, %v450, %v454
  %v459 = vand.u32 2147483647, %v448
  %vm460 = vcmp.eq.f32.partialorder %v459, 8.507059e+37
  %v461 = vand.u32 %v448, 2147483648
  %v462 = vor.u32 1.1754944e-38, %v461
  %v463 = vsel %vm460, %v462, %v458
  %v464 = vmul.f32 1.0, %v463
  %v465 = vrcp.pop %v449
  %v466 = vmul.f32 %v449, %v465
  %v467 = vsub.f32 1.0, %v466
  %v468 = vmul.f32 %v465, %v467
  %v469 = vadd.f32 %v465, %v468
  %vm470 = vweird.f32 %v449
  %vm471 = vweird.f32 %v465
  %vm472 = vmor %vm470, %vm471
  %v473 = vsel %vm472, %v465, %v469
  %v474 = vand.u32 2147483647, %v449
  %vm475 = vcmp.eq.f32.partialorder %v474, 8.507059e+37
  %v476 = vand.u32 %v449, 2147483648
  %v477 = vor.u32 1.1754944e-38, %v476
  %v478 = vsel %vm475, %v477, %v473
  %v479 = vmul.f32 1.0, %v478
  %v480 = vtanh.pop %v440
  %v481 = vtanh.pop %v441
  %v484 = vrot.slane %v392, 7
  %v485 = vrot.slane %v393, 7
  %v488 = vmul.f32 %v464, %v484
  %v489 = vmul.f32 %v479, %v485
  %492 = vrot.lane.b32.xlu0 %v480, 64
  %v493 = vpop.permute.xlu0 %492
  %494 = vrot.lane.b32.xlu0 %v481, 64
  %v495 = vpop.permute.xlu0 %494
  %v498 = vmul.f32 %v464, %v493
  %v499 = vmul.f32 %v479, %v495
  %502 = vrot.lane.b32.xlu0 %v498, 32
  %v503 = vpop.permute.xlu0 %502
  %504 = vrot.lane.b32.xlu0 %v499, 32
  %v505 = vpop.permute.xlu0 %504
  %v508 = vadd.f32 %v488, %v503
  %v509 = vadd.f32 %v489, %v505
  %v510 = vtanh.pop %v508
  %v511 = vtanh.pop %v509
  %514 = vrot.lane.b32.xlu0 %v510, 64
  %v515 = vpop.permute.xlu0 %514
  %516 = vrot.lane.b32.xlu0 %v511, 64
  %v517 = vpop.permute.xlu0 %516
  %v520 = vmul.f32 %v464, %v515
  %v521 = vmul.f32 %v479, %v517
  %v524 = vrot.slane %v520, 3
  %v525 = vrot.slane %v521, 2
  %v526 = vsel %vm179, %v525, %v524
  %527 = vrot.lane.b32.xlu0 %v526, 32
  %v528 = vpop.permute.xlu0 %527
  %v529 = vsel %vm72, %v528, 0
  %531 = vmatpush.msra.mxu0 0.0
  %532 = vmatpush.msra.mxu0 0.0
  %533 = vmatpush.msra.mxu0 0.0
  %534 = vmatpush.msra.mxu0 0.0
  %535 = vmatpush.msra.mxu0 0.0
  %536 = vmatpush.msra.mxu0 0.0
  %537 = vmatpush.msra.mxu0 0.0
  %538 = vmatpush.msra.mxu0 0.0
  %539 = vmatpush.msra.mxu0 0.0
  %540 = vmatpush.msra.mxu0 0.0
  %541 = vmatpush.msra.mxu0 0.0
  %542 = vmatpush.msra.mxu0 0.0
  %543 = vmatpush.msra.mxu0 %v29
  %544 = vmatpush.msra.mxu0 %v28
  %545 = vmatpush.msra.mxu0 %v27
  %546 = vmatpush.msra.mxu0 %v26
  %547 = vmatmul.f32.gmra.mxu0 %v529
  %v548 = vpop.f32.mrf.mxu0
  %v549 = vadd.f32 0.0, %v548
  %550 = vdwg.mxu0
  %v552 = vrot.slane %v549, 4
  %v553 = vrot.slane %v549, 5
  %v556 = vadd.f32 %v70, %v552
  %v557 = vadd.f32 %v71, %v553
  %v558 = vxor.u32 %v556, 2147483648
  %v559 = vxor.u32 %v557, 2147483648
  %v560 = vmul.f32 %v558, 1.442695
  %v561 = vpow.pop %v560
  %v562 = vmul.f32 %v559, 1.442695
  %v563 = vpow.pop %v562
  %v564 = vadd.f32 %v561, 1.0
  %v565 = vadd.f32 %v563, 1.0
  %v566 = vrcp.pop %v564
  %v567 = vmul.f32 %v564, %v566
  %v568 = vsub.f32 1.0, %v567
  %v569 = vmul.f32 %v566, %v568
  %v570 = vadd.f32 %v566, %v569
  %vm571 = vweird.f32 %v564
  %vm572 = vweird.f32 %v566
  %vm573 = vmor %vm571, %vm572
  %v574 = vsel %vm573, %v566, %v570
  %v575 = vand.u32 2147483647, %v564
  %vm576 = vcmp.eq.f32.partialorder %v575, 8.507059e+37
  %v577 = vand.u32 %v564, 2147483648
  %v578 = vor.u32 1.1754944e-38, %v577
  %v579 = vsel %vm576, %v578, %v574
  %v580 = vmul.f32 1.0, %v579
  %v581 = vrcp.pop %v565
  %v582 = vmul.f32 %v565, %v581
  %v583 = vsub.f32 1.0, %v582
  %v584 = vmul.f32 %v581, %v583
  %v585 = vadd.f32 %v581, %v584
  %vm586 = vweird.f32 %v565
  %vm587 = vweird.f32 %v581
  %vm588 = vmor %vm586, %vm587
  %v589 = vsel %vm588, %v581, %v585
  %v590 = vand.u32 2147483647, %v565
  %vm591 = vcmp.eq.f32.partialorder %v590, 8.507059e+37
  %v592 = vand.u32 %v565, 2147483648
  %v593 = vor.u32 1.1754944e-38, %v592
  %v594 = vsel %vm591, %v593, %v589
  %v595 = vmul.f32 1.0, %v594
  %v596 = vtanh.pop %v556
  %v597 = vtanh.pop %v557
  %v600 = vrot.slane %v508, 7
  %v601 = vrot.slane %v509, 7
  %v604 = vmul.f32 %v580, %v600
  %v605 = vmul.f32 %v595, %v601
  %608 = vrot.lane.b32.xlu0 %v596, 64
  %v609 = vpop.permute.xlu0 %608
  %610 = vrot.lane.b32.xlu0 %v597, 64
  %v611 = vpop.permute.xlu0 %610
  %v614 = vmul.f32 %v580, %v609
  %v615 = vmul.f32 %v595, %v611
  %618 = vrot.lane.b32.xlu0 %v614, 32
  %v619 = vpop.permute.xlu0 %618
  %620 = vrot.lane.b32.xlu0 %v615, 32
  %v621 = vpop.permute.xlu0 %620
  %v624 = vadd.f32 %v604, %v619
  %v625 = vadd.f32 %v605, %v621
  %v626 = vtanh.pop %v624
  %v627 = vtanh.pop %v625
  %630 = vrot.lane.b32.xlu0 %v626, 64
  %v631 = vpop.permute.xlu0 %630
  %632 = vrot.lane.b32.xlu0 %v627, 64
  %v633 = vpop.permute.xlu0 %632
  %v636 = vmul.f32 %v580, %v631
  %v637 = vmul.f32 %v595, %v633
  %v640 = vrot.slane %v636, 4
  %v641 = vrot.slane %v637, 3
  %v642 = vsel %vm179, %v641, %v640
  %643 = vrot.lane.b32.xlu0 %v642, 32
  %v644 = vpop.permute.xlu0 %643
  %v645 = vsel %vm72, %v644, 0
  %647 = vmatpush.msra.mxu0 0.0
  %648 = vmatpush.msra.mxu0 0.0
  %649 = vmatpush.msra.mxu0 0.0
  %650 = vmatpush.msra.mxu0 0.0
  %651 = vmatpush.msra.mxu0 0.0
  %652 = vmatpush.msra.mxu0 0.0
  %653 = vmatpush.msra.mxu0 0.0
  %654 = vmatpush.msra.mxu0 0.0
  %655 = vmatpush.msra.mxu0 0.0
  %656 = vmatpush.msra.mxu0 0.0
  %657 = vmatpush.msra.mxu0 0.0
  %658 = vmatpush.msra.mxu0 0.0
  %659 = vmatpush.msra.mxu0 %v29
  %660 = vmatpush.msra.mxu0 %v28
  %661 = vmatpush.msra.mxu0 %v27
  %662 = vmatpush.msra.mxu0 %v26
  %663 = vmatmul.f32.gmra.mxu0 %v645
  %v664 = vpop.f32.mrf.mxu0
  %v665 = vadd.f32 0.0, %v664
  %666 = vdwg.mxu0
  %v668 = vrot.slane %v665, 3
  %v669 = vrot.slane %v665, 4
  %v672 = vadd.f32 %v70, %v668
  %v673 = vadd.f32 %v71, %v669
  %v674 = vxor.u32 %v672, 2147483648
  %v675 = vxor.u32 %v673, 2147483648
  %v676 = vmul.f32 %v674, 1.442695
  %v677 = vpow.pop %v676
  %v678 = vmul.f32 %v675, 1.442695
  %v679 = vpow.pop %v678
  %v680 = vadd.f32 %v677, 1.0
  %v681 = vadd.f32 %v679, 1.0
  %v682 = vrcp.pop %v680
  %v683 = vmul.f32 %v680, %v682
  %v684 = vsub.f32 1.0, %v683
  %v685 = vmul.f32 %v682, %v684
  %v686 = vadd.f32 %v682, %v685
  %vm687 = vweird.f32 %v680
  %vm688 = vweird.f32 %v682
  %vm689 = vmor %vm687, %vm688
  %v690 = vsel %vm689, %v682, %v686
  %v691 = vand.u32 2147483647, %v680
  %vm692 = vcmp.eq.f32.partialorder %v691, 8.507059e+37
  %v693 = vand.u32 %v680, 2147483648
  %v694 = vor.u32 1.1754944e-38, %v693
  %v695 = vsel %vm692, %v694, %v690
  %v696 = vmul.f32 1.0, %v695
  %v697 = vrcp.pop %v681
  %v698 = vmul.f32 %v681, %v697
  %v699 = vsub.f32 1.0, %v698
  %v700 = vmul.f32 %v697, %v699
  %v701 = vadd.f32 %v697, %v700
  %vm702 = vweird.f32 %v681
  %vm703 = vweird.f32 %v697
  %vm704 = vmor %vm702, %vm703
  %v705 = vsel %vm704, %v697, %v701
  %v706 = vand.u32 2147483647, %v681
  %vm707 = vcmp.eq.f32.partialorder %v706, 8.507059e+37
  %v708 = vand.u32 %v681, 2147483648
  %v709 = vor.u32 1.1754944e-38, %v708
  %v710 = vsel %vm707, %v709, %v705
  %v711 = vmul.f32 1.0, %v710
  %v712 = vtanh.pop %v672
  %v713 = vtanh.pop %v673
  %v716 = vrot.slane %v624, 7
  %v717 = vrot.slane %v625, 7
  %v720 = vmul.f32 %v696, %v716
  %v721 = vmul.f32 %v711, %v717
  %724 = vrot.lane.b32.xlu0 %v712, 64
  %v725 = vpop.permute.xlu0 %724
  %726 = vrot.lane.b32.xlu0 %v713, 64
  %v727 = vpop.permute.xlu0 %726
  %v730 = vmul.f32 %v696, %v725
  %v731 = vmul.f32 %v711, %v727
  %734 = vrot.lane.b32.xlu0 %v730, 32
  %v735 = vpop.permute.xlu0 %734
  %736 = vrot.lane.b32.xlu0 %v731, 32
  %v737 = vpop.permute.xlu0 %736
  %v740 = vadd.f32 %v720, %v735
  %v741 = vadd.f32 %v721, %v737
  %v742 = vtanh.pop %v740
  %v743 = vtanh.pop %v741
  %746 = vrot.lane.b32.xlu0 %v742, 64
  %v747 = vpop.permute.xlu0 %746
  %748 = vrot.lane.b32.xlu0 %v743, 64
  %v749 = vpop.permute.xlu0 %748
  %v752 = vmul.f32 %v696, %v747
  %v753 = vmul.f32 %v711, %v749
  %v756 = vrot.slane %v752, 5
  %v757 = vrot.slane %v753, 4
  %v758 = vsel %vm179, %v757, %v756
  %759 = vrot.lane.b32.xlu0 %v758, 32
  %v760 = vpop.permute.xlu0 %759
  %v761 = vsel %vm72, %v760, 0
  %763 = vmatpush.msra.mxu0 0.0
  %764 = vmatpush.msra.mxu0 0.0
  %765 = vmatpush.msra.mxu0 0.0
  %766 = vmatpush.msra.mxu0 0.0
  %767 = vmatpush.msra.mxu0 0.0
  %768 = vmatpush.msra.mxu0 0.0
  %769 = vmatpush.msra.mxu0 0.0
  %770 = vmatpush.msra.mxu0 0.0
  %771 = vmatpush.msra.mxu0 0.0
  %772 = vmatpush.msra.mxu0 0.0
  %773 = vmatpush.msra.mxu0 0.0
  %774 = vmatpush.msra.mxu0 0.0
  %775 = vmatpush.msra.mxu0 %v29
  %776 = vmatpush.msra.mxu0 %v28
  %777 = vmatpush.msra.mxu0 %v27
  %778 = vmatpush.msra.mxu0 %v26
  %779 = vmatmul.f32.gmra.mxu0 %v761
  %v780 = vpop.f32.mrf.mxu0
  %v781 = vadd.f32 0.0, %v780
  %782 = vdwg.mxu0
  %v784 = vrot.slane %v781, 2
  %v785 = vrot.slane %v781, 3
  %v788 = vadd.f32 %v70, %v784
  %v789 = vadd.f32 %v71, %v785
  %v790 = vxor.u32 %v788, 2147483648
  %v791 = vxor.u32 %v789, 2147483648
  %v792 = vmul.f32 %v790, 1.442695
  %v793 = vpow.pop %v792
  %v794 = vmul.f32 %v791, 1.442695
  %v795 = vpow.pop %v794
  %v796 = vadd.f32 %v793, 1.0
  %v797 = vadd.f32 %v795, 1.0
  %v798 = vrcp.pop %v796
  %v799 = vmul.f32 %v796, %v798
  %v800 = vsub.f32 1.0, %v799
  %v801 = vmul.f32 %v798, %v800
  %v802 = vadd.f32 %v798, %v801
  %vm803 = vweird.f32 %v796
  %vm804 = vweird.f32 %v798
  %vm805 = vmor %vm803, %vm804
  %v806 = vsel %vm805, %v798, %v802
  %v807 = vand.u32 2147483647, %v796
  %vm808 = vcmp.eq.f32.partialorder %v807, 8.507059e+37
  %v809 = vand.u32 %v796, 2147483648
  %v810 = vor.u32 1.1754944e-38, %v809
  %v811 = vsel %vm808, %v810, %v806
  %v812 = vmul.f32 1.0, %v811
  %v813 = vrcp.pop %v797
  %v814 = vmul.f32 %v797, %v813
  %v815 = vsub.f32 1.0, %v814
  %v816 = vmul.f32 %v813, %v815
  %v817 = vadd.f32 %v813, %v816
  %vm818 = vweird.f32 %v797
  %vm819 = vweird.f32 %v813
  %vm820 = vmor %vm818, %vm819
  %v821 = vsel %vm820, %v813, %v817
  %v822 = vand.u32 2147483647, %v797
  %vm823 = vcmp.eq.f32.partialorder %v822, 8.507059e+37
  %v824 = vand.u32 %v797, 2147483648
  %v825 = vor.u32 1.1754944e-38, %v824
  %v826 = vsel %vm823, %v825, %v821
  %v827 = vmul.f32 1.0, %v826
  %v828 = vtanh.pop %v788
  %v829 = vtanh.pop %v789
  %v832 = vrot.slane %v740, 7
  %v833 = vrot.slane %v741, 7
  %v836 = vmul.f32 %v812, %v832
  %v837 = vmul.f32 %v827, %v833
  %840 = vrot.lane.b32.xlu0 %v828, 64
  %v841 = vpop.permute.xlu0 %840
  %842 = vrot.lane.b32.xlu0 %v829, 64
  %v843 = vpop.permute.xlu0 %842
  %v846 = vmul.f32 %v812, %v841
  %v847 = vmul.f32 %v827, %v843
  %850 = vrot.lane.b32.xlu0 %v846, 32
  %v851 = vpop.permute.xlu0 %850
  %852 = vrot.lane.b32.xlu0 %v847, 32
  %v853 = vpop.permute.xlu0 %852
  %v856 = vadd.f32 %v836, %v851
  %v857 = vadd.f32 %v837, %v853
  %v858 = vtanh.pop %v856
  %v859 = vtanh.pop %v857
  %862 = vrot.lane.b32.xlu0 %v858, 64
  %v863 = vpop.permute.xlu0 %862
  %864 = vrot.lane.b32.xlu0 %v859, 64
  %v865 = vpop.permute.xlu0 %864
  %v868 = vmul.f32 %v812, %v863
  %v869 = vmul.f32 %v827, %v865
  %v872 = vrot.slane %v868, 6
  %v873 = vrot.slane %v869, 5
  %v874 = vsel %vm179, %v873, %v872
  %875 = vrot.lane.b32.xlu0 %v874, 32
  %v876 = vpop.permute.xlu0 %875
  %v877 = vsel %vm72, %v876, 0
  %879 = vmatpush.msra.mxu0 0.0
  %880 = vmatpush.msra.mxu0 0.0
  %881 = vmatpush.msra.mxu0 0.0
  %882 = vmatpush.msra.mxu0 0.0
  %883 = vmatpush.msra.mxu0 0.0
  %884 = vmatpush.msra.mxu0 0.0
  %885 = vmatpush.msra.mxu0 0.0
  %886 = vmatpush.msra.mxu0 0.0
  %887 = vmatpush.msra.mxu0 0.0
  %888 = vmatpush.msra.mxu0 0.0
  %889 = vmatpush.msra.mxu0 0.0
  %890 = vmatpush.msra.mxu0 0.0
  %891 = vmatpush.msra.mxu0 %v29
  %892 = vmatpush.msra.mxu0 %v28
  %893 = vmatpush.msra.mxu0 %v27
  %894 = vmatpush.msra.mxu0 %v26
  %895 = vmatmul.f32.gmra.mxu0 %v877
  %v896 = vpop.f32.mrf.mxu0
  %v897 = vadd.f32 0.0, %v896
  %898 = vdwg.mxu0
  %v900 = vrot.slane %v897, 1
  %v901 = vrot.slane %v897, 2
  %v904 = vadd.f32 %v70, %v900
  %v905 = vadd.f32 %v71, %v901
  %v906 = vxor.u32 %v904, 2147483648
  %v907 = vxor.u32 %v905, 2147483648
  %v908 = vmul.f32 %v906, 1.442695
  %v909 = vpow.pop %v908
  %v910 = vmul.f32 %v907, 1.442695
  %v911 = vpow.pop %v910
  %v912 = vadd.f32 %v909, 1.0
  %v913 = vadd.f32 %v911, 1.0
  %v914 = vrcp.pop %v912
  %v915 = vmul.f32 %v912, %v914
  %v916 = vsub.f32 1.0, %v915
  %v917 = vmul.f32 %v914, %v916
  %v918 = vadd.f32 %v914, %v917
  %vm919 = vweird.f32 %v912
  %vm920 = vweird.f32 %v914
  %vm921 = vmor %vm919, %vm920
  %v922 = vsel %vm921, %v914, %v918
  %v923 = vand.u32 2147483647, %v912
  %vm924 = vcmp.eq.f32.partialorder %v923, 8.507059e+37
  %v925 = vand.u32 %v912, 2147483648
  %v926 = vor.u32 1.1754944e-38, %v925
  %v927 = vsel %vm924, %v926, %v922
  %v928 = vmul.f32 1.0, %v927
  %v929 = vrcp.pop %v913
  %v930 = vmul.f32 %v913, %v929
  %v931 = vsub.f32 1.0, %v930
  %v932 = vmul.f32 %v929, %v931
  %v933 = vadd.f32 %v929, %v932
  %vm934 = vweird.f32 %v913
  %vm935 = vweird.f32 %v929
  %vm936 = vmor %vm934, %vm935
  %v937 = vsel %vm936, %v929, %v933
  %v938 = vand.u32 2147483647, %v913
  %vm939 = vcmp.eq.f32.partialorder %v938, 8.507059e+37
  %v940 = vand.u32 %v913, 2147483648
  %v941 = vor.u32 1.1754944e-38, %v940
  %v942 = vsel %vm939, %v941, %v937
  %v943 = vmul.f32 1.0, %v942
  %v944 = vtanh.pop %v904
  %v945 = vtanh.pop %v905
  %v948 = vrot.slane %v856, 7
  %v949 = vrot.slane %v857, 7
  %v952 = vmul.f32 %v928, %v948
  %v953 = vmul.f32 %v943, %v949
  %956 = vrot.lane.b32.xlu0 %v944, 64
  %v957 = vpop.permute.xlu0 %956
  %958 = vrot.lane.b32.xlu0 %v945, 64
  %v959 = vpop.permute.xlu0 %958
  %v962 = vmul.f32 %v928, %v957
  %v963 = vmul.f32 %v943, %v959
  %966 = vrot.lane.b32.xlu0 %v962, 32
  %v967 = vpop.permute.xlu0 %966
  %968 = vrot.lane.b32.xlu0 %v963, 32
  %v969 = vpop.permute.xlu0 %968
  %v972 = vadd.f32 %v952, %v967
  %v973 = vadd.f32 %v953, %v969
  %v974 = vtanh.pop %v972
  %v975 = vtanh.pop %v973
  %978 = vrot.lane.b32.xlu0 %v974, 64
  %v979 = vpop.permute.xlu0 %978
  %980 = vrot.lane.b32.xlu0 %v975, 64
  %v981 = vpop.permute.xlu0 %980
  %v984 = vmul.f32 %v928, %v979
  %v985 = vmul.f32 %v943, %v981
  %v986 = vld [vmem:[%s4] sm:$0xff]
  %v987 = vld [vmem:[%s4 + $0x8] sm:$0xff]
  %v988 = vld [vmem:[%s4 + $0x10] sm:$0xff]
  %v989 = vld [vmem:[%s4 + $0x18] sm:$0xff]
  %v990 = vld [vmem:[#allocation2] sm:$0x1]
  %995 = vset.pattern.permute.xlu0 0
  %996 = vperm.xlu0 %995, %v986
  %v997 = vpop.permute.xlu0 %996
  %998 = vset.pattern.permute.xlu0 0
  %999 = vperm.xlu0 %998, %v987
  %v1000 = vpop.permute.xlu0 %999
  %1001 = vset.pattern.permute.xlu0 0
  %1002 = vperm.xlu0 %1001, %v988
  %v1003 = vpop.permute.xlu0 %1002
  %1004 = vset.pattern.permute.xlu0 0
  %1005 = vperm.xlu0 %1004, %v989
  %v1006 = vpop.permute.xlu0 %1005
  %v1007 = vlaneseq
  %v1008 = vand.u32 %v1007, 127
  %v1009 = vadd.s32 %v1008, 4294967200
  %v1010 = vperm.slane %v997, %v1009
  %v1011 = vadd.s32 %v1008, 4294967192
  %v1012 = vperm.slane %v1000, %v1011
  %vm1013 = vcmask 917312
  %v1014 = vsel %vm1013, %v1012, %v1010
  %v1015 = vadd.s32 %v1008, 4294967184
  %v1016 = vperm.slane %v1003, %v1015
  %vm1017 = vcmask 982912
  %v1018 = vsel %vm1017, %v1016, %v1014
  %v1019 = vadd.s32 %v1008, 4294967176
  %v1020 = vperm.slane %v1006, %v1019
  %vm1021 = vcmask 1048512
  %v1022 = vsel %vm1021, %v1020, %v1018
  %v1024 = vmul.f32 %v984, %v1022
  %v1025 = vmul.f32 %v985, %v1022
  %v1028 = vrot.slane %v1025, 7
  %1029 = vrot.lane.b32.xlu0 %v1024, 32
  %v1030 = vpop.permute.xlu0 %1029
  %1031 = vrot.lane.b32.xlu0 %v1028, 32
  %v1032 = vpop.permute.xlu0 %1031
  %vm1035 = vcmask 261127
  %v1036 = vsel %vm1035, %v1030, 0.0
  %1037 = vadd.xlane.f32.xlu0 %v1036
  %v1038 = vpop.xlane.xlu0 %1037
  %vm1039 = vcmask 253952
  %v1040 = vsel %vm1039, %v1032, 0.0
  %1041 = vadd.xlane.f32.xlu0 %v1040
  %v1042 = vpop.xlane.xlu0 %1041
  %v1044 = vperm.slane %v990, 0
  %v1046 = vadd.f32 %v1038, %v1044
  %v1047 = vadd.f32 %v1042, %v1044
  %vm1048 = vcmask 7175
  %1049 = vst.msk [vmem:[%s6 - $0x7] sm:$0x80] %vm1048, %v1046
  %vm1050 = vcmask 0
  %1051 = vst.msk [vmem:[%s6 + $0x1] sm:$0x1] %vm1050, %v1047
  // Predicated region
  $region26: #{tpu_custom_call.1} parent=0 // pred_check
    _
  $region27: #{tpu_custom_call.1} parent=0 // pred_check_branch
    %1053 = sbr.rel (0) target = $region29
  $region28: #{tpu_custom_call.1} parent=0 // pred_region
    _
  $region29: #{tpu_custom_call.1} parent=0 // pred_fallthru
    _
  // Predicated region
  $region30: #{tpu_custom_call.1} parent=0 // pred_check
    _
  $region31: #{tpu_custom_call.1} parent=0 // pred_check_branch
    %1055 = sbr.rel (0) target = $region33
  $region32: #{tpu_custom_call.1} parent=0 // pred_region
    _
  $region33: #{tpu_custom_call.1} parent=0 // pred_fallthru
    _

</llo_original>
